<compile_context>
chip_gen: v6e
topology: v6e:2x2x1
jax: 0.10.0
libtpu: 0.0.40
codegen_flags: <defaults>
</compile_context>

<pallas_src>
import numpy as np
import jax
import jax.numpy as jnp
from jax.experimental import pallas as pl
from jax.experimental.pallas import tpu as pltpu


# ----------------------------------------------------------------------------
# Kernel 1: per-point MLP (conv_1, conv_2) + running max-pool over points.
# ----------------------------------------------------------------------------
def conv_pool_kernel(x_ref, w1_ref, t1_ref, w2_ref, t2_ref, pooled_ref):
    n = pl.program_id(1)                       # point-tile index (reduction axis)
    tb, tn, din = x_ref.shape

    x = x_ref[...].reshape(tb * tn, din)       # bf16, (TB*TN, Din)

    # conv_1 (1x1 conv == per-point linear) with folded bias/BN_1, + ReLU
    h1 = jnp.dot(x, w1_ref[...], preferred_element_type=jnp.float32) + t1_ref[...]
    h1 = jnp.maximum(h1, 0.0)                  # (TB*TN, 64) f32

    # conv_2 with folded bias/BN_2, + ReLU
    h2 = jnp.dot(h1.astype(w2_ref.dtype), w2_ref[...],
                 preferred_element_type=jnp.float32) + t2_ref[...]
    h2 = jnp.maximum(h2, 0.0)                  # (TB*TN, 512) f32

    # per-batch max over this tile of points
    tile_max = h2.reshape(tb, tn, h2.shape[-1]).max(axis=1)   # (TB, 512)

    # running max across point tiles, accumulated in the resident output block
    @pl.when(n == 0)
    def _():
        pooled_ref[...] = tile_max

    @pl.when(n > 0)
    def _():
        pooled_ref[...] = jnp.maximum(pooled_ref[...], tile_max)


# ----------------------------------------------------------------------------
# Kernel 2: batched FC head (fc_1 + BN_3 + ReLU, fc_2 + identity), lane-padded.
# ----------------------------------------------------------------------------
def head_kernel(p_ref, w3_ref, t3_ref, w4_ref, b4_ref, out_ref):
    p = p_ref[...].astype(w3_ref.dtype)        # (B, 512) bf16
    h3 = jnp.dot(p, w3_ref[...], preferred_element_type=jnp.float32) + t3_ref[...]
    h3 = jnp.maximum(h3, 0.0)                  # (B, 256) f32
    out_ref[...] = jnp.dot(h3.astype(w4_ref.dtype), w4_ref[...],
                           preferred_element_type=jnp.float32) + b4_ref[...]


# ----------------------------------------------------------------------------
# Parameter folding: bias + BN scale/shift folded into weights, eye into b4.
# ----------------------------------------------------------------------------
def fold_params(params, output_dim, kk_pad):
    (w1, b1, s1, t1, w2, b2, s2, t2, w3, b3, s3, t3, w4, b4, eye_flat) = params
    kk = output_dim * output_dim

    w1f = (w1 * s1).astype(jnp.bfloat16)       # (Din, 64)
    t1f = b1 * s1 + t1                         # (1, 64)   f32
    w2f = (w2 * s2).astype(jnp.bfloat16)       # (64, 512)
    t2f = b2 * s2 + t2                         # (1, 512)  f32
    w3f = (w3 * s3).astype(jnp.bfloat16)       # (512, 256)
    t3f = b3 * s3 + t3                         # (1, 256)  f32

    # fc_2 weights/bias padded on the lane dim to kk_pad (lane-dense stores).
    w4p = jnp.zeros((w4.shape[0], kk_pad), jnp.float32).at[:, :kk].set(w4)
    b4p = jnp.zeros((1, kk_pad), jnp.float32).at[:, :kk].set(b4 + eye_flat)
    w4f = w4p.astype(jnp.bfloat16)             # (256, kk_pad)

    return (w1f, t1f, w2f, t2f), (w3f, t3f, w4f, b4p)


def _largest_divisor_leq(n, cap):
    for d in range(min(n, cap), 0, -1):
        if n % d == 0:
            return d
    return 1


def _pick_tn(n_points, cap):
    cap = max(8, cap)
    if n_points <= cap:
        return n_points
    fallback = 1
    for t in range(cap, 0, -1):
        if n_points % t == 0:
            if t % 8 == 0:
                return t
            if fallback == 1:
                fallback = t
    return fallback


# ----------------------------------------------------------------------------
# Wrapper
# ----------------------------------------------------------------------------
def transformation_net(x, params, output_dim, *, tb=None, tn=None):
    B, N, Din = x.shape
    K = output_dim
    KK = K * K
    KK_pad = ((KK + 127) // 128) * 128          # lane-dense head output width

    (w1f, t1f, w2f, t2f), (w3f, t3f, w4f, b4p) = fold_params(params, output_dim, KK_pad)

    # Tile sizes: bound TB*TN so the (TB*TN, 512) f32 temp stays ~4 MiB
    # (safe within the scoped-VMEM budget on v5e/v6e/v7x).
    if tb is None:
        tb = _largest_divisor_leq(B, 8)
    if tn is None:
        tn = _pick_tn(N, 2048 // tb)
    assert B % tb == 0 and N % tn == 0, "tb/tn must divide B/N"

    x_bf16 = x.astype(jnp.bfloat16)             # halves HBM bytes for x

    def wspec(p):
        return pl.BlockSpec(p.shape, lambda b, n: (0, 0))

    pooled = pl.pallas_call(
        conv_pool_kernel,
        out_shape=jax.ShapeDtypeStruct((B, 512), jnp.float32),
        grid=(B // tb, N // tn),                # N (reduction) axis last
        in_specs=[pl.BlockSpec((tb, tn, Din), lambda b, n: (b, n, 0)),
                  wspec(w1f), wspec(t1f), wspec(w2f), wspec(t2f)],
        out_specs=pl.BlockSpec((tb, 512), lambda b, n: (b, 0)),
        compiler_params=pltpu.CompilerParams(
            dimension_semantics=("parallel", "arbitrary"),
            vmem_limit_bytes=32 * 1024 * 1024),
    )(x_bf16, w1f, t1f, w2f, t2f)

    def hspec(p):
        return pl.BlockSpec(p.shape, lambda i: (0, 0))

    head_out = pl.pallas_call(
        head_kernel,
        out_shape=jax.ShapeDtypeStruct((B, KK_pad), jnp.float32),
        grid=(1,),
        in_specs=[hspec(pooled), hspec(w3f), hspec(t3f), hspec(w4f), hspec(b4p)],
        out_specs=pl.BlockSpec((B, KK_pad), lambda i: (0, 0)),
        compiler_params=pltpu.CompilerParams(
            dimension_semantics=("arbitrary",)),
    )(pooled, w3f, t3f, w4f, b4p)

    return head_out[:, :KK].reshape(B, K, K)


# ----------------------------------------------------------------------------
# Deterministic synthetic parameters (shapes as in TransformationNet.__init__).
# ----------------------------------------------------------------------------
def make_params(key, input_dim, output_dim):
    K = output_dim
    ks = jax.random.split(key, 20)
    eps = 1e-5

    def rnd(k, shape, scale=0.1):
        return scale * jax.random.normal(k, shape, dtype=jnp.float32)

    def bn_fold(kg, kb, km, kv, c):
        gamma = 1.0 + rnd(kg, (1, c))
        beta = rnd(kb, (1, c))
        mean = rnd(km, (1, c))
        var = 1.0 + jnp.abs(rnd(kv, (1, c)))
        scale = gamma / jnp.sqrt(var + eps)
        shift = beta - mean * scale
        return scale, shift

    w1 = rnd(ks[0], (input_dim, 64))
    b1 = rnd(ks[1], (1, 64))
    s1, t1 = bn_fold(ks[2], ks[3], ks[4], ks[5], 64)

    w2 = rnd(ks[6], (64, 512))
    b2 = rnd(ks[7], (1, 512))
    s2, t2 = bn_fold(ks[8], ks[9], ks[10], ks[11], 512)

    w3 = rnd(ks[12], (512, 256))
    b3 = rnd(ks[13], (1, 256))
    s3, t3 = bn_fold(ks[14], ks[15], ks[16], ks[17], 256)

    w4 = rnd(ks[18], (256, K * K))
    b4 = rnd(ks[19], (1, K * K))

    eye_flat = jnp.eye(K, dtype=jnp.float32).reshape(1, K * K)

    return (w1, b1, s1, t1, w2, b2, s2, t2, w3, b3, s3, t3, w4, b4, eye_flat)


def reference_forward(x, params, output_dim):
    """Plain-JAX f32 reference matching the PyTorch forward (eval-mode BN)."""
    (w1, b1, s1, t1, w2, b2, s2, t2, w3, b3, s3, t3, w4, b4, eye_flat) = params
    K = output_dim
    h1 = jnp.maximum((x @ w1 + b1) * s1 + t1, 0.0)              # (B, N, 64)
    h2 = jnp.maximum((h1 @ w2 + b2) * s2 + t2, 0.0)             # (B, N, 512)
    pooled = jnp.max(h2, axis=1)                                 # (B, 512)
    h3 = jnp.maximum((pooled @ w3 + b3) * s3 + t3, 0.0)          # (B, 256)
    h4 = pooled @ jnp.zeros_like(w3)[:, :0] if False else h3 @ w4 + b4
    return (h4 + eye_flat).reshape(-1, K, K)


if __name__ == "__main__":
    B, N = 2, 16            # batch, num_points
    input_dim = 4           # point feature dim
    output_dim = 4          # K x K transform

    key = jax.random.PRNGKey(0)
    kx, kp = jax.random.split(key)
    x = jax.random.normal(kx, (B, N, input_dim), dtype=jnp.float32)
    params = make_params(kp, input_dim, output_dim)

    # tn=8 exercises the multi-tile running-max path; tb=2 packs both batch
    # elements into one grid step.
    out = transformation_net(x, params, output_dim, tb=2, tn=8)
    out = jax.block_until_ready(out)

    ref = reference_forward(x, params, output_dim)
    # bf16 MXU operands with f32 accumulation -> relaxed tolerance vs f32 ref.
    np.testing.assert_allclose(np.asarray(out), np.asarray(ref), rtol=2e-2, atol=2e-2)

    print("KERNEL_OK")
</pallas_src>

<mosaic_0001>
module attributes {stable_mosaic.version = 11 : i64} {
  func.func @conv_pool_kernel(%arg0: i32, %arg1: i32, %arg2: memref<2x8x4xbf16, #tpu.memory_space<vmem>>, %arg3: memref<4x64xbf16, #tpu.memory_space<vmem>>, %arg4: memref<1x64xf32, #tpu.memory_space<vmem>>, %arg5: memref<64x512xbf16, #tpu.memory_space<vmem>>, %arg6: memref<1x512xf32, #tpu.memory_space<vmem>>, %arg7: memref<2x512xf32, #tpu.memory_space<vmem>>) attributes {dimension_semantics = [#tpu.dimension_semantics<parallel>, #tpu.dimension_semantics<arbitrary>], iteration_bounds = array<i64: 1, 2>, scalar_prefetch = 0 : i64, scratch_operands = 0 : i64, tpu.core_type = #tpu.core_type<tc>, window_params = [{transform_indices = @transform_0, window_bounds = array<i64: 2, 8, 4>}, {pipeline_mode = #tpu.pipeline_mode<synchronous>, transform_indices = @transform_1, window_bounds = array<i64: 4, 64>}, {pipeline_mode = #tpu.pipeline_mode<synchronous>, transform_indices = @transform_2, window_bounds = array<i64: 1, 64>}, {pipeline_mode = #tpu.pipeline_mode<synchronous>, transform_indices = @transform_3, window_bounds = array<i64: 64, 512>}, {pipeline_mode = #tpu.pipeline_mode<synchronous>, transform_indices = @transform_4, window_bounds = array<i64: 1, 512>}, {transform_indices = @transform_5, window_bounds = array<i64: 2, 512>}]} {
    %c0 = arith.constant 0 : index
    %c0_0 = arith.constant 0 : index
    %c0_1 = arith.constant 0 : index
    %0 = vector.load %arg2[%c0, %c0_0, %c0_1] : memref<2x8x4xbf16, #tpu.memory_space<vmem>>, vector<2x8x4xbf16>
    %1 = vector.shape_cast %0 : vector<2x8x4xbf16> to vector<16x4xbf16>
    %c0_2 = arith.constant 0 : index
    %c0_3 = arith.constant 0 : index
    %2 = vector.load %arg3[%c0_2, %c0_3] : memref<4x64xbf16, #tpu.memory_space<vmem>>, vector<4x64xbf16>
    %cst = arith.constant dense<0.000000e+00> : vector<16x64xf32>
    %3 = tpu.matmul %1, %2, %cst {dimension_numbers = #tpu.dot_dimension_numbers<[1], [0], [0], [1], [0, 0, 1, 1], [], []>} : vector<16x4xbf16>, vector<4x64xbf16>, vector<16x64xf32> -> vector<16x64xf32>
    %c0_4 = arith.constant 0 : index
    %c0_5 = arith.constant 0 : index
    %4 = vector.load %arg4[%c0_4, %c0_5] : memref<1x64xf32, #tpu.memory_space<vmem>>, vector<1x64xf32>
    %5 = vector.broadcast %4 : vector<1x64xf32> to vector<16x64xf32>
    %6 = arith.addf %3, %5 : vector<16x64xf32>
    %cst_6 = arith.constant 0.000000e+00 : f32
    %7 = vector.broadcast %cst_6 : f32 to vector<16x64xf32>
    %8 = arith.maximumf %6, %7 : vector<16x64xf32>
    %9 = arith.truncf %8 : vector<16x64xf32> to vector<16x64xbf16>
    %c0_7 = arith.constant 0 : index
    %c0_8 = arith.constant 0 : index
    %10 = vector.load %arg5[%c0_7, %c0_8] : memref<64x512xbf16, #tpu.memory_space<vmem>>, vector<64x512xbf16>
    %cst_9 = arith.constant dense<0.000000e+00> : vector<16x512xf32>
    %11 = tpu.matmul %9, %10, %cst_9 {dimension_numbers = #tpu.dot_dimension_numbers<[1], [0], [0], [1], [0, 0, 1, 1], [], []>} : vector<16x64xbf16>, vector<64x512xbf16>, vector<16x512xf32> -> vector<16x512xf32>
    %c0_10 = arith.constant 0 : index
    %c0_11 = arith.constant 0 : index
    %12 = vector.load %arg6[%c0_10, %c0_11] : memref<1x512xf32, #tpu.memory_space<vmem>>, vector<1x512xf32>
    %13 = vector.broadcast %12 : vector<1x512xf32> to vector<16x512xf32>
    %14 = arith.addf %11, %13 : vector<16x512xf32>
    %cst_12 = arith.constant 0.000000e+00 : f32
    %15 = vector.broadcast %cst_12 : f32 to vector<16x512xf32>
    %16 = arith.maximumf %14, %15 : vector<16x512xf32>
    %17 = vector.shape_cast %16 : vector<16x512xf32> to vector<2x8x512xf32>
    %cst_13 = arith.constant dense<0xFF800000> : vector<2x512xf32>
    %18 = vector.multi_reduction <maximumf>, %17, %cst_13 [1] : vector<2x8x512xf32> to vector<2x512xf32>
    %c0_i32 = arith.constant 0 : i32
    %19 = arith.cmpi eq, %arg1, %c0_i32 : i32
    %20 = arith.extui %19 : i1 to i32
    %c0_i32_14 = arith.constant 0 : i32
    %21 = arith.cmpi ne, %20, %c0_i32_14 : i32
    scf.if %21 {
      %c0_17 = arith.constant 0 : index
      %c0_18 = arith.constant 0 : index
      %25 = vector.load %arg7[%c0_17, %c0_18] : memref<2x512xf32, #tpu.memory_space<vmem>>, vector<2x512xf32>
      tpu.vector_store %arg7[%c0_17, %c0_18], %18 {strides = array<i32>} : memref<2x512xf32, #tpu.memory_space<vmem>>, vector<2x512xf32>,
    } else {
    }
    %c0_i32_15 = arith.constant 0 : i32
    %22 = arith.cmpi sgt, %arg1, %c0_i32_15 : i32
    %23 = arith.extui %22 : i1 to i32
    %c0_i32_16 = arith.constant 0 : i32
    %24 = arith.cmpi ne, %23, %c0_i32_16 : i32
    scf.if %24 {
      %c0_17 = arith.constant 0 : index
      %c0_18 = arith.constant 0 : index
      %25 = vector.load %arg7[%c0_17, %c0_18] : memref<2x512xf32, #tpu.memory_space<vmem>>, vector<2x512xf32>
      %26 = arith.maximumf %25, %18 : vector<2x512xf32>
      %c0_19 = arith.constant 0 : index
      %c0_20 = arith.constant 0 : index
      %27 = vector.load %arg7[%c0_19, %c0_20] : memref<2x512xf32, #tpu.memory_space<vmem>>, vector<2x512xf32>
      tpu.vector_store %arg7[%c0_19, %c0_20], %26 {strides = array<i32>} : memref<2x512xf32, #tpu.memory_space<vmem>>, vector<2x512xf32>,
    } else {
    }
    return
  }
  func.func @transform_0(%arg0: i32, %arg1: i32) -> (i32, i32, i32) {
    %c0_i32 = arith.constant 0 : i32
    %c0_i32_0 = arith.constant 0 : i32
    return %arg0, %arg1, %c0_i32 : i32, i32, i32
  }
  func.func @transform_1(%arg0: i32, %arg1: i32) -> (i32, i32) {
    %c0_i32 = arith.constant 0 : i32
    %c0_i32_0 = arith.constant 0 : i32
    %c0_i32_1 = arith.constant 0 : i32
    return %c0_i32, %c0_i32_0 : i32, i32
  }
  func.func @transform_2(%arg0: i32, %arg1: i32) -> (i32, i32) {
    %c0_i32 = arith.constant 0 : i32
    %c0_i32_0 = arith.constant 0 : i32
    %c0_i32_1 = arith.constant 0 : i32
    return %c0_i32, %c0_i32_0 : i32, i32
  }
  func.func @transform_3(%arg0: i32, %arg1: i32) -> (i32, i32) {
    %c0_i32 = arith.constant 0 : i32
    %c0_i32_0 = arith.constant 0 : i32
    %c0_i32_1 = arith.constant 0 : i32
    return %c0_i32, %c0_i32_0 : i32, i32
  }
  func.func @transform_4(%arg0: i32, %arg1: i32) -> (i32, i32) {
    %c0_i32 = arith.constant 0 : i32
    %c0_i32_0 = arith.constant 0 : i32
    %c0_i32_1 = arith.constant 0 : i32
    return %c0_i32, %c0_i32_0 : i32, i32
  }
  func.func @transform_5(%arg0: i32, %arg1: i32) -> (i32, i32) {
    %c0_i32 = arith.constant 0 : i32
    %c0_i32_0 = arith.constant 0 : i32
    return %arg0, %c0_i32 : i32, i32
  }
}

</mosaic_0001>

<llo_original>
// kernel: tpu_custom_call.1
$region0: #{tpu_custom_call.1}
  #allocation0 [shape = 'u32[]', space=smem, size = 0x4, offset = 0x4, fixed_abs, tag = 'smem constant byte address 0x4 - core index']
  #allocation1 [shape = 'u32[144,128]{1,0:T(1,128)}', space=vmem, size = 0x12000, scoped, tag = 'internal scratch']
  %s0 = inlined_call_operand.vmem [shape: bf16[2,16,4], index: 0, kind: input, shape index: {}]
  %s1 = inlined_call_operand.vmem [shape: bf16[4,64], index: 1, kind: input, shape index: {}]
  %s2 = inlined_call_operand.vmem [shape: f32[1,64], index: 2, kind: input, shape index: {}]
  %s3 = inlined_call_operand.hbm [shape: bf16[64,512], index: 3, kind: input, shape index: {}]
  %s4 = inlined_call_operand.vmem [shape: f32[1,512], index: 4, kind: input, shape index: {}]
  %s5 = inlined_call_operand.hbm [shape: f32[2,512], index: 5, kind: output, shape index: {}]
  %s6 = sld [smem:[#allocation0]]
  $region106: #{tpu_custom_call.1} parent=0
    _
  %s8 = ssub.s32 1, %s6
  %s9 = scalar_select 0, %s8, %s6
  $region1: #{tpu_custom_call.1} parent=0
    #allocation2 [shape = 'u8[8192]{0}', space=vmem, size = 0x2000, scoped, tag = 'input window, operand 0']
    #allocation3 [shape = 'u8[65536]{0}', space=vmem, size = 0x10000, scoped, tag = 'input window, operand 3, single buffered']
    #allocation4 [shape = 's32[2]{0}', space=sflag, size = 0x8, scoped, tag = 'scoped memory for tpu_custom_call.1']
    #allocation5 [shape = 's32[2]{0}', space=sflag, size = 0x8, scoped, tag = 'scoped memory for tpu_custom_call.1']
    #allocation6 [shape = 'u8[4096]{0}', space=vmem, size = 0x1000, scoped, tag = 'output window, operand 0, single buffered']
    %10 = vsyncpa [#allocation4], 0
    %11 = vsyncpa [#allocation5], 0
    loop: start=0, step=1, limit=4
    $region2: #{tpu_custom_call.1} parent=1 // loop_pre_header
      _
    $region3: #{tpu_custom_call.1} parent=1 // loop_header
      %s13 = sphi 0, %s17
      %p14 = scmp.ge.s32.totalorder %s13, 4
      %s20 = sphi 0, %s32
      %s21 = sphi 0, %s28
      %s22 = sphi 0, %s20
      %s23 = sphi 0, %s21
      %s24 = sphi 0, %s22
      %s25 = sphi 0, %s23
      %s37 = sphi 0, %s39
      %s40 = sphi 0, %s37
      %s41 = sphi 0, %s40
      %s57 = sphi 0, %s41
      %s61 = sphi 0, %s61
      %s63 = sphi 0, %s61
      %s64 = sphi 0, %s63
      %s78 = sphi 0, %s64
      %s82 = sphi 0, %s82
      %s84 = sphi 0, %s82
      %s85 = sphi 0, %s84
      %s99 = sphi 0, %s85
      %s103 = sphi 0, %s103
      %s105 = sphi 0, %s103
      %s106 = sphi 0, %s105
      %s120 = sphi 0, %s106
      %s124 = sphi 0, %s124
      %s126 = sphi 0, %s124
      %s127 = sphi 0, %s126
      %s141 = sphi 0, %s127
      %s147 = sphi 0, %s149
      %s150 = sphi 0, %s147
      %s151 = sphi 0, %s150
      %s167 = sphi 0, %s151
    $region4: #{tpu_custom_call.1} parent=1 // loop_header_branch
      %16 = sbr.rel (%p14) target = $region8
    $region5: #{tpu_custom_call.1} parent=1 // loop_body
      %s18 = ssub.s32 %s13, 1
      %s19 = ssub.s32 %s13, 2
      %s26 = sadd.s32 1, %s21
      %p27 = scmp.ge.s32.totalorder %s26, 2
      %s28 = scalar_select %p27, 0, %s26
      %s29 = sadd.s32 1, %s20
      %s30 = scalar_select %p27, %s29, %s20
      %p31 = scmp.ge.s32.totalorder %s30, 1
      %s32 = scalar_select %p31, 0, %s30
      %s33 = ssub.s32 %s20, %s32
      %s34 = ssub.s32 %s21, %s28
      %s35 = sor.u32 %s33, %s34
      %p36 = scmp.eq.s32.totalorder %s35, 0
      %s38 = sadd.s32 %s37, 1
      %s39 = scalar_select %p36, %s37, %s38
      %p42 = pneg %p36
      %p43 = scmp.eq.s32.totalorder %s13, 1
      %p44 = por %p42, %p43
      %p45 = scmp.ne.s32.totalorder %s37, %s40
      %p46 = scmp.eq.s32.totalorder %s13, 0
      %p47 = por %p45, %p46
      %p48 = scmp.ne.s32.totalorder %s37, %s40
      %p49 = scmp.eq.s32.totalorder %s18, 1
      %p50 = por %p48, %p49
      %p51 = scmp.ne.s32.totalorder %s40, %s41
      %p52 = scmp.eq.s32.totalorder %s18, 0
      %p53 = por %p51, %p52
      %p54 = scmp.ne.s32.totalorder %s40, %s41
      %p55 = scmp.eq.s32.totalorder %s19, 1
      %p56 = por %p54, %p55
      %p58 = scmp.ne.s32.totalorder %s41, %s57
      %p59 = scmp.eq.s32.totalorder %s19, 0
      %p60 = por %p58, %p59
      %s62 = sadd.s32 %s61, 1
      %p65 = scmp.eq.s32.totalorder %s13, 1
      %p66 = scmp.ne.s32.totalorder %s61, %s63
      %p67 = scmp.eq.s32.totalorder %s13, 0
      %p68 = por %p66, %p67
      %p69 = scmp.ne.s32.totalorder %s61, %s63
      %p70 = scmp.eq.s32.totalorder %s18, 1
      %p71 = por %p69, %p70
      %p72 = scmp.ne.s32.totalorder %s63, %s64
      %p73 = scmp.eq.s32.totalorder %s18, 0
      %p74 = por %p72, %p73
      %p75 = scmp.ne.s32.totalorder %s63, %s64
      %p76 = scmp.eq.s32.totalorder %s19, 1
      %p77 = por %p75, %p76
      %p79 = scmp.ne.s32.totalorder %s64, %s78
      %p80 = scmp.eq.s32.totalorder %s19, 0
      %p81 = por %p79, %p80
      %s83 = sadd.s32 %s82, 1
      %p86 = scmp.eq.s32.totalorder %s13, 1
      %p87 = scmp.ne.s32.totalorder %s82, %s84
      %p88 = scmp.eq.s32.totalorder %s13, 0
      %p89 = por %p87, %p88
      %p90 = scmp.ne.s32.totalorder %s82, %s84
      %p91 = scmp.eq.s32.totalorder %s18, 1
      %p92 = por %p90, %p91
      %p93 = scmp.ne.s32.totalorder %s84, %s85
      %p94 = scmp.eq.s32.totalorder %s18, 0
      %p95 = por %p93, %p94
      %p96 = scmp.ne.s32.totalorder %s84, %s85
      %p97 = scmp.eq.s32.totalorder %s19, 1
      %p98 = por %p96, %p97
      %p100 = scmp.ne.s32.totalorder %s85, %s99
      %p101 = scmp.eq.s32.totalorder %s19, 0
      %p102 = por %p100, %p101
      %s104 = sadd.s32 %s103, 1
      %p107 = scmp.eq.s32.totalorder %s13, 1
      %p108 = scmp.ne.s32.totalorder %s103, %s105
      %p109 = scmp.eq.s32.totalorder %s13, 0
      %p110 = por %p108, %p109
      %p111 = scmp.ne.s32.totalorder %s103, %s105
      %p112 = scmp.eq.s32.totalorder %s18, 1
      %p113 = por %p111, %p112
      %p114 = scmp.ne.s32.totalorder %s105, %s106
      %p115 = scmp.eq.s32.totalorder %s18, 0
      %p116 = por %p114, %p115
      %p117 = scmp.ne.s32.totalorder %s105, %s106
      %p118 = scmp.eq.s32.totalorder %s19, 1
      %p119 = por %p117, %p118
      %p121 = scmp.ne.s32.totalorder %s106, %s120
      %p122 = scmp.eq.s32.totalorder %s19, 0
      %p123 = por %p121, %p122
      %s125 = sadd.s32 %s124, 1
      %p128 = scmp.eq.s32.totalorder %s13, 1
      %p129 = scmp.ne.s32.totalorder %s124, %s126
      %p130 = scmp.eq.s32.totalorder %s13, 0
      %p131 = por %p129, %p130
      %p132 = scmp.ne.s32.totalorder %s124, %s126
      %p133 = scmp.eq.s32.totalorder %s18, 1
      %p134 = por %p132, %p133
      %p135 = scmp.ne.s32.totalorder %s126, %s127
      %p136 = scmp.eq.s32.totalorder %s18, 0
      %p137 = por %p135, %p136
      %p138 = scmp.ne.s32.totalorder %s126, %s127
      %p139 = scmp.eq.s32.totalorder %s19, 1
      %p140 = por %p138, %p139
      %p142 = scmp.ne.s32.totalorder %s127, %s141
      %p143 = scmp.eq.s32.totalorder %s19, 0
      %p144 = por %p142, %p143
      %s145 = ssub.s32 %s20, %s32
      %p146 = scmp.eq.s32.totalorder %s145, 0
      %s148 = sadd.s32 %s147, 1
      %s149 = scalar_select %p146, %s147, %s148
      %p152 = pneg %p146
      %p153 = scmp.eq.s32.totalorder %s13, 1
      %p154 = por %p152, %p153
      %p155 = scmp.ne.s32.totalorder %s147, %s150
      %p156 = scmp.eq.s32.totalorder %s13, 0
      %p157 = por %p155, %p156
      %p158 = scmp.ne.s32.totalorder %s147, %s150
      %p159 = scmp.eq.s32.totalorder %s18, 1
      %p160 = por %p158, %p159
      %p161 = scmp.ne.s32.totalorder %s150, %s151
      %p162 = scmp.eq.s32.totalorder %s18, 0
      %p163 = por %p161, %p162
      %p164 = scmp.ne.s32.totalorder %s150, %s151
      %p165 = scmp.eq.s32.totalorder %s19, 1
      %p166 = por %p164, %p165
      %p168 = scmp.ne.s32.totalorder %s151, %s167
      %p169 = scmp.eq.s32.totalorder %s19, 0
      %p170 = por %p168, %p169
      %p171 = scmp.le.s32.totalorder 1, %s13
      %p172 = scmp.lt.s32.totalorder %s13, 3
      %p173 = pnand %p171, %p172
      %p174 = pneg %p173
      // Predicated region
      $region9: #{tpu_custom_call.1} parent=5 // pred_check
        _
      $region10: #{tpu_custom_call.1} parent=5 // pred_check_branch
        %176 = sbr.rel (%p173) target = $region12
      $region11: #{tpu_custom_call.1} parent=5 // pred_region
        %s177 = ssub.s32 %s13, 1
        // Predicated region
        $region13: #{tpu_custom_call.1} parent=11 // pred_check
          %p178 = pneg %p74
        $region14: #{tpu_custom_call.1} parent=11 // pred_check_branch
          %180 = sbr.rel (%p178) target = $region16
        $region15: #{tpu_custom_call.1} parent=11 // pred_region
          _
        $region16: #{tpu_custom_call.1} parent=11 // pred_fallthru
          _
        // Predicated region
        $region17: #{tpu_custom_call.1} parent=11 // pred_check
          %p181 = pneg %p95
        $region18: #{tpu_custom_call.1} parent=11 // pred_check_branch
          %183 = sbr.rel (%p181) target = $region20
        $region19: #{tpu_custom_call.1} parent=11 // pred_region
          _
        $region20: #{tpu_custom_call.1} parent=11 // pred_fallthru
          _
        // Predicated region
        $region21: #{tpu_custom_call.1} parent=11 // pred_check
          %p184 = pneg %p116
        $region22: #{tpu_custom_call.1} parent=11 // pred_check_branch
          %186 = sbr.rel (%p184) target = $region24
        $region23: #{tpu_custom_call.1} parent=11 // pred_region
          %s188 = ssub.s32 2048, 2048
          %189 = vsyncadd [#allocation4], %s188
          %s190 = sshll.u32 [#allocation3], 4
          %s191 = int_to_ptr.vmem [resolvable:$true] %s190
          %196 = dma.hbm_to_vmem [thread:$0]  %s3, 2048, %s191, [#allocation4], 256, 256, 16
        $region24: #{tpu_custom_call.1} parent=11 // pred_fallthru
          _
        // Predicated region
        $region25: #{tpu_custom_call.1} parent=11 // pred_check
          %p197 = pneg %p137
        $region26: #{tpu_custom_call.1} parent=11 // pred_check_branch
          %199 = sbr.rel (%p197) target = $region28
        $region27: #{tpu_custom_call.1} parent=11 // pred_region
          _
        $region28: #{tpu_custom_call.1} parent=11 // pred_fallthru
          _
      $region12: #{tpu_custom_call.1} parent=5 // pred_fallthru
        _
      %p200 = scmp.lt.s32.totalorder %s13, 2
      // Predicated region
      $region29: #{tpu_custom_call.1} parent=5 // pred_check
        %p201 = pneg %p200
      $region30: #{tpu_custom_call.1} parent=5 // pred_check_branch
        %203 = sbr.rel (%p201) target = $region32
      $region31: #{tpu_custom_call.1} parent=5 // pred_region
        // Predicated region
        $region33: #{tpu_custom_call.1} parent=31 // pred_check
          %p204 = pneg %p47
        $region34: #{tpu_custom_call.1} parent=31 // pred_check_branch
          %206 = sbr.rel (%p204) target = $region36
        $region35: #{tpu_custom_call.1} parent=31 // pred_region
          %s207 = sand.u32 %s37, 1
          %s208 = sand.u32 %s37, 1
          %s209 = smul.addr %s208, 8
          %s210 = scalar_lea.vmem [#allocation2], %s209
          %s211 = smul.u32 2, %s20
          %s212 = smul.addr %s211, 2
          %s213 = sadd.s32 %s21, %s212
          %s214 = smul.addr %s213, 4
          %s215 = scalar_lea.vmem %s0, %s214
          // Predicated region
          $region37: #{tpu_custom_call.1} parent=35 // pred_check
            _
          $region38: #{tpu_custom_call.1} parent=35 // pred_check_branch
            %217 = sbr.rel (0) target = $region40
          $region39: #{tpu_custom_call.1} parent=35 // pred_region
            // Predicated region
            $region41: #{tpu_custom_call.1} parent=39 // pred_check
              _
            $region42: #{tpu_custom_call.1} parent=39 // pred_check_branch
              %219 = sbr.rel target = $region44
            $region43: #{tpu_custom_call.1} parent=39 // pred_region
              // Predicated region
              $region56: #{tpu_custom_call.1} parent=43 // pred_check
                _
              $region57: #{tpu_custom_call.1} parent=43 // pred_check_branch
                %237 = sbr.rel (0) target = $region59
              $region58: #{tpu_custom_call.1} parent=43 // pred_region
                loop: start=0, step=1, limit=1
                $region60: #{tpu_custom_call.1} parent=58 // loop_pre_header
                  _
                $region61: #{tpu_custom_call.1} parent=58 // loop_header
                  %s239 = sphi 0, %s243
                  %p240 = scmp.ge.s32.totalorder %s239, 1
                  %s244 = sphi %s215, %s215
                  %s245 = sphi %s210, %s210
                $region62: #{tpu_custom_call.1} parent=58 // loop_header_branch
                  %242 = sbr.rel (%p240) target = $region66
                $region63: #{tpu_custom_call.1} parent=58 // loop_body
                  _
                $region64: #{tpu_custom_call.1} parent=58 // loop_footer
                  %s243 = sadd.s32 1, %s239
                $region65: #{tpu_custom_call.1} parent=58 // loop_footer_branch
                  %238 = sbr.rel target = $region61
                $region66: #{tpu_custom_call.1} parent=58 // loop_exit
                  _
                %s247 = ssub.s32 16, 1
                loop: start=0, step=1, limit=1
                $region67: #{tpu_custom_call.1} parent=58 // loop_pre_header
                  _
                $region68: #{tpu_custom_call.1} parent=58 // loop_header
                  %s249 = sphi 0, %s253
                  %p250 = scmp.ge.s32.totalorder %s249, 1
                  %s254 = sphi %s215, %s215
                  %s255 = sphi %s210, %s210
                $region69: #{tpu_custom_call.1} parent=58 // loop_header_branch
                  %252 = sbr.rel (%p250) target = $region73
                $region70: #{tpu_custom_call.1} parent=58 // loop_body
                  %v256 = vld [vmem:[%s254] sm:%s247]
                  %257 = vst [vmem:[%s255] sm:%s247] %v256
                  %v258 = vld [vmem:[%s254 + $0x8] sm:%s247]
                  %259 = vst [vmem:[%s255 + $0x4] sm:%s247] %v258
                $region71: #{tpu_custom_call.1} parent=58 // loop_footer
                  %s253 = sadd.s32 1, %s249
                $region72: #{tpu_custom_call.1} parent=58 // loop_footer_branch
                  %248 = sbr.rel target = $region68
                $region73: #{tpu_custom_call.1} parent=58 // loop_exit
                  _
              $region59: #{tpu_custom_call.1} parent=43 // pred_fallthru
                _
            $region44: #{tpu_custom_call.1} parent=39 // pred_fallthru
              _
            // Predicated region
            $region45: #{tpu_custom_call.1} parent=39 // pred_check
              _
            $region46: #{tpu_custom_call.1} parent=39 // pred_check_branch
              %221 = sbr.rel (0) target = $region48
            $region47: #{tpu_custom_call.1} parent=39 // pred_region
              %s223 = ssub.s32 16, 1
              loop: start=0, step=1, limit=1
              $region49: #{tpu_custom_call.1} parent=47 // loop_pre_header
                _
              $region50: #{tpu_custom_call.1} parent=47 // loop_header
                %s225 = sphi 0, %s229
                %p226 = scmp.ge.s32.totalorder %s225, 1
                %s230 = sphi %s215, %s215
                %s231 = sphi %s210, %s210
              $region51: #{tpu_custom_call.1} parent=47 // loop_header_branch
                %228 = sbr.rel (%p226) target = $region55
              $region52: #{tpu_custom_call.1} parent=47 // loop_body
                %v232 = vld [vmem:[%s230] sm:%s223]
                %233 = vst [vmem:[%s231] sm:%s223] %v232
                %v234 = vld [vmem:[%s230 + $0x8] sm:%s223]
                %235 = vst [vmem:[%s231 + $0x4] sm:%s223] %v234
              $region53: #{tpu_custom_call.1} parent=47 // loop_footer
                %s229 = sadd.s32 1, %s225
              $region54: #{tpu_custom_call.1} parent=47 // loop_footer_branch
                %224 = sbr.rel target = $region50
              $region55: #{tpu_custom_call.1} parent=47 // loop_exit
                _
            $region48: #{tpu_custom_call.1} parent=39 // pred_fallthru
              _
          $region40: #{tpu_custom_call.1} parent=35 // pred_fallthru
            _
          %260 = vnop
        $region36: #{tpu_custom_call.1} parent=31 // pred_fallthru
          _
      $region32: #{tpu_custom_call.1} parent=5 // pred_fallthru
        _
      %p261 = scmp.le.s32.totalorder 1, %s13
      %p262 = scmp.lt.s32.totalorder %s13, 3
      %p263 = pnand %p261, %p262
      %p264 = pneg %p263
      // Predicated region
      $region74: #{tpu_custom_call.1} parent=5 // pred_check
        _
      $region75: #{tpu_custom_call.1} parent=5 // pred_check_branch
        %266 = sbr.rel (%p263) target = $region77
      $region76: #{tpu_custom_call.1} parent=5 // pred_region
        %s267 = ssub.s32 %s13, 1
        %s268 = sand.u32 %s40, 1
        %s269 = sand.u32 %s40, 1
        %s270 = smul.addr %s269, 8
        %s271 = scalar_lea.vmem [#allocation2], %s270
        // Predicated region
        $region78: #{tpu_custom_call.1} parent=76 // pred_check
          %p272 = pneg %p53
        $region79: #{tpu_custom_call.1} parent=76 // pred_check_branch
          %274 = sbr.rel (%p272) target = $region81
        $region80: #{tpu_custom_call.1} parent=76 // pred_region
          _
        $region81: #{tpu_custom_call.1} parent=76 // pred_fallthru
          _
        // Predicated region
        $region82: #{tpu_custom_call.1} parent=76 // pred_check
          %p275 = pneg %p116
        $region83: #{tpu_custom_call.1} parent=76 // pred_check_branch
          %277 = sbr.rel (%p275) target = $region85
        $region84: #{tpu_custom_call.1} parent=76 // pred_region
          %278 = dma.done [#allocation4], 2048
        $region85: #{tpu_custom_call.1} parent=76 // pred_fallthru
          _
        %s279 = sand.u32 %s40, 1
        %s280 = sand.u32 %s40, 1
        %s281 = smul.addr %s280, 8
        %s282 = scalar_lea.vmem [#allocation2], %s281
        %p283 = pneg %p53
        %p284 = pneg %p50
        %p285 = pneg %p74
        %p286 = pneg %p71
        %p287 = pneg %p95
        %p288 = pneg %p92
        %p289 = pneg %p116
        %p290 = pneg %p113
        %p291 = pneg %p137
        %p292 = pneg %p134
        %p293 = pneg %p163
        %p294 = pneg %p160
        %s295 = smul.u32 2, %s22
        %v297 = vld [vmem:[%s271] sm:$0xf]
        %v298 = vld [vmem:[%s271 + $0x4] sm:$0xf]
        %v299 = vld [vmem:[%s1] sm:$0x3]
        %v300 = vld [vmem:[%s2] sm:$0x1]
        %v302 = vlaneseq
        %v303 = vshrl.u32 %v302, 7
        %v304 = vsub.s32 0, %v303
        %v305 = vrot.slane %v300, %v304
        %v309 = vunpack.c.l.b16 %v297
        %v310 = vunpack.c.l.b16 %v298
        %v311 = vpack.c.b16 %v310, %v309
        %vm312 = vcmask 31744
        %v314 = vsel %vm312, %v311, 0
        %vm316 = vcmask 1041408
        %v318 = vsel %vm316, %v299, 0
        %320 = vmatprep.subr.bf16.mxu0 0
        %321 = vmatpush1.bf16.msra.mxu0 0
        %322 = vmatprep.subr.bf16.mxu0 0
        %323 = vmatpush1.bf16.msra.mxu0 0
        %324 = vmatprep.subr.bf16.mxu0 0
        %325 = vmatpush1.bf16.msra.mxu0 0
        %326 = vmatprep.subr.bf16.mxu0 0
        %327 = vmatpush1.bf16.msra.mxu0 0
        %328 = vmatprep.subr.bf16.mxu0 0
        %329 = vmatpush1.bf16.msra.mxu0 0
        %330 = vmatprep.subr.bf16.mxu0 0
        %331 = vmatpush1.bf16.msra.mxu0 0
        %332 = vmatprep.subr.bf16.mxu0 0
        %333 = vmatpush1.bf16.msra.mxu0 0
        %334 = vmatprep.subr.bf16.mxu0 0
        %335 = vmatpush1.bf16.msra.mxu0 %v318
        %336 = vmatprep.subr.bf16.mxu0 0
        %337 = vmatpush2.bf16.msra.mxu0 0
        %338 = vmatprep.subr.bf16.mxu0 0
        %339 = vmatpush2.bf16.msra.mxu0 0
        %340 = vmatprep.subr.bf16.mxu0 0
        %341 = vmatpush2.bf16.msra.mxu0 0
        %342 = vmatprep.subr.bf16.mxu0 0
        %343 = vmatpush2.bf16.msra.mxu0 0
        %344 = vmatprep.subr.bf16.mxu0 0
        %345 = vmatpush2.bf16.msra.mxu0 0
        %346 = vmatprep.subr.bf16.mxu0 0
        %347 = vmatpush2.bf16.msra.mxu0 0
        %348 = vmatprep.subr.bf16.mxu0 0
        %349 = vmatpush2.bf16.msra.mxu0 0
        %350 = vmatprep.subr.bf16.mxu0 0
        %351 = vmatpush2.bf16.msra.mxu0 0
        %352 = vmatprep.mubr.bf16.mxu0 0
        %353 = vmatmul.mubr.bf16.gmra.mxu0 %v314
        %v354 = vpop.f32.mrf.mxu0
        %v355 = vadd.f32 %v305, %v354
        %v356 = vpop.f32.mrf.mxu0
        %v357 = vpop.f32.mrf.mxu0
        %v358 = vadd.f32 %v305, %v357
        %v359 = vpop.f32.mrf.mxu0
        %360 = vdwg.mxu0
        %v361 = vmax.f32 %v355, 0.0
        %v362 = vmax.f32 %v358, 0.0
        %v363 = vpack.c.bf16 %v362, %v361
        %v364 = vld [vmem:[#allocation3] sm:$0xff]
        %v365 = vld [vmem:[#allocation3 + $0x8] sm:$0xff]
        %v366 = vld [vmem:[#allocation3 + $0x10] sm:$0xff]
        %v367 = vld [vmem:[#allocation3 + $0x18] sm:$0xff]
        %v368 = vld [vmem:[#allocation3 + $0x20] sm:$0xff]
        %v369 = vld [vmem:[#allocation3 + $0x28] sm:$0xff]
        %v370 = vld [vmem:[#allocation3 + $0x30] sm:$0xff]
        %v371 = vld [vmem:[#allocation3 + $0x38] sm:$0xff]
        %v372 = vld [vmem:[#allocation3 + $0x40] sm:$0xff]
        %v373 = vld [vmem:[#allocation3 + $0x48] sm:$0xff]
        %v374 = vld [vmem:[#allocation3 + $0x50] sm:$0xff]
        %v375 = vld [vmem:[#allocation3 + $0x58] sm:$0xff]
        %v376 = vld [vmem:[#allocation3 + $0x60] sm:$0xff]
        %v377 = vld [vmem:[#allocation3 + $0x68] sm:$0xff]
        %v378 = vld [vmem:[#allocation3 + $0x70] sm:$0xff]
        %v379 = vld [vmem:[#allocation3 + $0x78] sm:$0xff]
        %v380 = vld [vmem:[%s4] sm:$0xf]
        %v382 = vlaneseq
        %v383 = vshrl.u32 %v382, 7
        %v384 = vsub.s32 0, %v383
        %v385 = vrot.slane %v380, %v384
        %v386 = vlaneseq
        %v387 = vshrl.u32 %v386, 7
        %v388 = vsub.s32 1, %v387
        %v389 = vrot.slane %v380, %v388
        %v390 = vlaneseq
        %v391 = vshrl.u32 %v390, 7
        %v392 = vsub.s32 2, %v391
        %v393 = vrot.slane %v380, %v392
        %v394 = vlaneseq
        %v395 = vshrl.u32 %v394, 7
        %v396 = vsub.s32 3, %v395
        %v397 = vrot.slane %v380, %v396
        %v418 = vunpack.c.l.b16 %v364
        %v419 = vunpack.c.h.b16 %v364
        %v420 = vunpack.c.l.b16 %v365
        %v421 = vunpack.c.h.b16 %v365
        %v422 = vunpack.c.l.b16 %v366
        %v423 = vunpack.c.h.b16 %v366
        %v424 = vunpack.c.l.b16 %v367
        %v425 = vunpack.c.h.b16 %v367
        %v426 = vunpack.c.l.b16 %v368
        %v427 = vunpack.c.h.b16 %v368
        %v428 = vunpack.c.l.b16 %v369
        %v429 = vunpack.c.h.b16 %v369
        %v430 = vunpack.c.l.b16 %v370
        %v431 = vunpack.c.h.b16 %v370
        %v432 = vunpack.c.l.b16 %v371
        %v433 = vunpack.c.h.b16 %v371
        %v434 = vunpack.c.l.b16 %v372
        %v435 = vunpack.c.h.b16 %v372
        %v436 = vunpack.c.l.b16 %v373
        %v437 = vunpack.c.h.b16 %v373
        %v438 = vunpack.c.l.b16 %v374
        %v439 = vunpack.c.h.b16 %v374
        %v440 = vunpack.c.l.b16 %v375
        %v441 = vunpack.c.h.b16 %v375
        %v442 = vunpack.c.l.b16 %v376
        %v443 = vunpack.c.h.b16 %v376
        %v444 = vunpack.c.l.b16 %v377
        %v445 = vunpack.c.h.b16 %v377
        %v446 = vunpack.c.l.b16 %v378
        %v447 = vunpack.c.h.b16 %v378
        %v448 = vunpack.c.l.b16 %v379
        %v449 = vunpack.c.h.b16 %v379
        %v450 = vpack.c.b16 %v422, %v418
        %v451 = vpack.c.b16 %v423, %v419
        %v452 = vpack.c.b16 %v424, %v420
        %v453 = vpack.c.b16 %v425, %v421
        %v454 = vpack.c.b16 %v430, %v426
        %v455 = vpack.c.b16 %v431, %v427
        %v456 = vpack.c.b16 %v432, %v428
        %v457 = vpack.c.b16 %v433, %v429
        %v458 = vpack.c.b16 %v438, %v434
        %v459 = vpack.c.b16 %v439, %v435
        %v460 = vpack.c.b16 %v440, %v436
        %v461 = vpack.c.b16 %v441, %v437
        %v462 = vpack.c.b16 %v446, %v442
        %v463 = vpack.c.b16 %v447, %v443
        %v464 = vpack.c.b16 %v448, %v444
        %v465 = vpack.c.b16 %v449, %v445
        %vm482 = vcmask 523264
        %v484 = vsel %vm482, %v363, 0
        %486 = vmatprep.subr.bf16.mxu0 0
        %487 = vmatpush1.bf16.msra.mxu0 0
        %488 = vmatprep.subr.bf16.mxu0 0
        %489 = vmatpush1.bf16.msra.mxu0 0
        %490 = vmatprep.subr.bf16.mxu0 0
        %491 = vmatpush1.bf16.msra.mxu0 0
        %492 = vmatprep.subr.bf16.mxu0 0
        %493 = vmatpush1.bf16.msra.mxu0 0
        %494 = vmatprep.subr.bf16.mxu0 %v463
        %495 = vmatpush1.bf16.msra.mxu0 %v462
        %496 = vmatprep.subr.bf16.mxu0 %v459
        %497 = vmatpush1.bf16.msra.mxu0 %v458
        %498 = vmatprep.subr.bf16.mxu0 %v455
        %499 = vmatpush1.bf16.msra.mxu0 %v454
        %500 = vmatprep.subr.bf16.mxu0 %v451
        %501 = vmatpush1.bf16.msra.mxu0 %v450
        %502 = vmatprep.subr.bf16.mxu0 0
        %503 = vmatpush2.bf16.msra.mxu0 0
        %504 = vmatprep.subr.bf16.mxu0 0
        %505 = vmatpush2.bf16.msra.mxu0 0
        %506 = vmatprep.subr.bf16.mxu0 0
        %507 = vmatpush2.bf16.msra.mxu0 0
        %508 = vmatprep.subr.bf16.mxu0 0
        %509 = vmatpush2.bf16.msra.mxu0 0
        %510 = vmatprep.subr.bf16.mxu0 0
        %511 = vmatpush2.bf16.msra.mxu0 0
        %512 = vmatprep.subr.bf16.mxu0 0
        %513 = vmatpush2.bf16.msra.mxu0 0
        %514 = vmatprep.subr.bf16.mxu0 0
        %515 = vmatpush2.bf16.msra.mxu0 0
        %516 = vmatprep.subr.bf16.mxu0 0
        %517 = vmatpush2.bf16.msra.mxu0 0
        %518 = vmatprep.mubr.bf16.mxu0 0
        %519 = vmatmul.mubr.bf16.gmra.mxu0 %v484
        %v520 = vpop.f32.mrf.mxu0
        %v521 = vadd.f32 %v385, %v520
        %v522 = vpop.f32.mrf.mxu0
        %v523 = vadd.f32 %v389, %v522
        %v524 = vpop.f32.mrf.mxu0
        %v525 = vadd.f32 %v385, %v524
        %v526 = vpop.f32.mrf.mxu0
        %v527 = vadd.f32 %v389, %v526
        %528 = vdwg.mxu0
        %529 = vmatprep.subr.bf16.mxu0 0
        %530 = vmatpush1.bf16.msra.mxu0 0
        %531 = vmatprep.subr.bf16.mxu0 0
        %532 = vmatpush1.bf16.msra.mxu0 0
        %533 = vmatprep.subr.bf16.mxu0 0
        %534 = vmatpush1.bf16.msra.mxu0 0
        %535 = vmatprep.subr.bf16.mxu0 0
        %536 = vmatpush1.bf16.msra.mxu0 0
        %537 = vmatprep.subr.bf16.mxu0 %v465
        %538 = vmatpush1.bf16.msra.mxu0 %v464
        %539 = vmatprep.subr.bf16.mxu0 %v461
        %540 = vmatpush1.bf16.msra.mxu0 %v460
        %541 = vmatprep.subr.bf16.mxu0 %v457
        %542 = vmatpush1.bf16.msra.mxu0 %v456
        %543 = vmatprep.subr.bf16.mxu0 %v453
        %544 = vmatpush1.bf16.msra.mxu0 %v452
        %545 = vmatprep.subr.bf16.mxu0 0
        %546 = vmatpush2.bf16.msra.mxu0 0
        %547 = vmatprep.subr.bf16.mxu0 0
        %548 = vmatpush2.bf16.msra.mxu0 0
        %549 = vmatprep.subr.bf16.mxu0 0
        %550 = vmatpush2.bf16.msra.mxu0 0
        %551 = vmatprep.subr.bf16.mxu0 0
        %552 = vmatpush2.bf16.msra.mxu0 0
        %553 = vmatprep.subr.bf16.mxu0 0
        %554 = vmatpush2.bf16.msra.mxu0 0
        %555 = vmatprep.subr.bf16.mxu0 0
        %556 = vmatpush2.bf16.msra.mxu0 0
        %557 = vmatprep.subr.bf16.mxu0 0
        %558 = vmatpush2.bf16.msra.mxu0 0
        %559 = vmatprep.subr.bf16.mxu0 0
        %560 = vmatpush2.bf16.msra.mxu0 0
        %561 = vmatprep.mubr.bf16.mxu0 0
        %562 = vmatmul.mubr.bf16.gmra.mxu0 %v484
        %v563 = vpop.f32.mrf.mxu0
        %v564 = vadd.f32 %v393, %v563
        %v565 = vpop.f32.mrf.mxu0
        %v566 = vadd.f32 %v397, %v565
        %v567 = vpop.f32.mrf.mxu0
        %v568 = vadd.f32 %v393, %v567
        %v569 = vpop.f32.mrf.mxu0
        %v570 = vadd.f32 %v397, %v569
        %571 = vdwg.mxu0
        %v572 = vmax.f32 %v521, 0.0
        %v573 = vmax.f32 %v523, 0.0
        %v574 = vmax.f32 %v564, 0.0
        %v575 = vmax.f32 %v566, 0.0
        %v576 = vmax.f32 %v525, 0.0
        %v577 = vmax.f32 %v527, 0.0
        %v578 = vmax.f32 %v568, 0.0
        %v579 = vmax.f32 %v570, 0.0
        %v580 = vrot.slane %v572, 4
        %v581 = vmax.f32 %v572, %v580
        %v582 = vrot.slane %v581, 2
        %v583 = vmax.f32 %v581, %v582
        %v584 = vrot.slane %v583, 1
        %v585 = vmax.f32 %v583, %v584
        %v586 = vrot.slane %v573, 4
        %v587 = vmax.f32 %v573, %v586
        %v588 = vrot.slane %v587, 2
        %v589 = vmax.f32 %v587, %v588
        %v590 = vrot.slane %v589, 1
        %v591 = vmax.f32 %v589, %v590
        %v592 = vrot.slane %v574, 4
        %v593 = vmax.f32 %v574, %v592
        %v594 = vrot.slane %v593, 2
        %v595 = vmax.f32 %v593, %v594
        %v596 = vrot.slane %v595, 1
        %v597 = vmax.f32 %v595, %v596
        %v598 = vrot.slane %v575, 4
        %v599 = vmax.f32 %v575, %v598
        %v600 = vrot.slane %v599, 2
        %v601 = vmax.f32 %v599, %v600
        %v602 = vrot.slane %v601, 1
        %v603 = vmax.f32 %v601, %v602
        %v604 = vrot.slane %v576, 4
        %v605 = vmax.f32 %v576, %v604
        %v606 = vrot.slane %v605, 2
        %v607 = vmax.f32 %v605, %v606
        %v608 = vrot.slane %v607, 1
        %v609 = vmax.f32 %v607, %v608
        %v610 = vrot.slane %v577, 4
        %v611 = vmax.f32 %v577, %v610
        %v612 = vrot.slane %v611, 2
        %v613 = vmax.f32 %v611, %v612
        %v614 = vrot.slane %v613, 1
        %v615 = vmax.f32 %v613, %v614
        %v616 = vrot.slane %v578, 4
        %v617 = vmax.f32 %v578, %v616
        %v618 = vrot.slane %v617, 2
        %v619 = vmax.f32 %v617, %v618
        %v620 = vrot.slane %v619, 1
        %v621 = vmax.f32 %v619, %v620
        %v622 = vrot.slane %v579, 4
        %v623 = vmax.f32 %v579, %v622
        %v624 = vrot.slane %v623, 2
        %v625 = vmax.f32 %v623, %v624
        %v626 = vrot.slane %v625, 1
        %v627 = vmax.f32 %v625, %v626
        %p628 = scmp.eq.s32.totalorder %s23, 0
        // Predicated region
        $region86: #{tpu_custom_call.1} parent=76 // pred_check
          %p629 = pneg %p628
        $region87: #{tpu_custom_call.1} parent=76 // pred_check_branch
          %631 = sbr.rel (%p629) target = $region89
        $region88: #{tpu_custom_call.1} parent=76 // pred_region
          %v640 = vcombine.low %v585, %v591
          %v641 = vcombine.low %v597, %v603
          %v643 = vunpack.c.l.s4 1983009808
          %v644 = vunpack.c.0.s8 %v643
          %v645 = vlaneseq
          %v646 = vshrl.u32 %v645, 7
          %v647 = vsub.s32 %v644, %v646
          %v648 = vrot.slane %v640, %v647
          %v650 = vunpack.c.l.s4 1983009808
          %v651 = vunpack.c.0.s8 %v650
          %v652 = vlaneseq
          %v653 = vshrl.u32 %v652, 7
          %v654 = vsub.s32 %v651, %v653
          %v655 = vrot.slane %v641, %v654
          %v656 = vcombine.low %v648, %v655
          %v657 = vcombine.low %v609, %v615
          %v658 = vcombine.low %v621, %v627
          %v660 = vunpack.c.l.s4 1983009808
          %v661 = vunpack.c.0.s8 %v660
          %v662 = vlaneseq
          %v663 = vshrl.u32 %v662, 7
          %v664 = vsub.s32 %v661, %v663
          %v665 = vrot.slane %v657, %v664
          %v667 = vunpack.c.l.s4 1983009808
          %v668 = vunpack.c.0.s8 %v667
          %v669 = vlaneseq
          %v670 = vshrl.u32 %v669, 7
          %v671 = vsub.s32 %v668, %v670
          %v672 = vrot.slane %v658, %v671
          %v673 = vcombine.low %v665, %v672
          %vm674 = vcmask 1044484
          %v675 = vsel %vm674, %v656, %v656
          %vm676 = vcmask 1046534
          %v677 = vsel %vm676, %v656, %v675
          %v678 = vrot.slane %v673, 7
          %vm679 = vcmask 1041409
          %v680 = vsel %vm679, %v678, %v677
          %vm681 = vcmask 1043459
          %v682 = vsel %vm681, %v678, %v680
          %vm683 = vcmask 1045509
          %v684 = vsel %vm683, %v678, %v682
          %vm685 = vcmask 1047559
          %v686 = vsel %vm685, %v678, %v684
          %688 = vst [vmem:[#allocation6] sm:$0xff] %v686
        $region89: #{tpu_custom_call.1} parent=76 // pred_fallthru
          _
        %p689 = scmp.gt.s32.totalorder %s23, 0
        // Predicated region
        $region90: #{tpu_custom_call.1} parent=76 // pred_check
          %p690 = pneg %p689
        $region91: #{tpu_custom_call.1} parent=76 // pred_check_branch
          %692 = sbr.rel (%p690) target = $region93
        $region92: #{tpu_custom_call.1} parent=76 // pred_region
          %v693 = vld [vmem:[#allocation6] sm:$0xff]
          %v702 = vcombine.low %v585, %v591
          %v703 = vcombine.low %v597, %v603
          %v705 = vunpack.c.l.s4 1983009808
          %v706 = vunpack.c.0.s8 %v705
          %v707 = vlaneseq
          %v708 = vshrl.u32 %v707, 7
          %v709 = vsub.s32 %v706, %v708
          %v710 = vrot.slane %v702, %v709
          %v712 = vunpack.c.l.s4 1983009808
          %v713 = vunpack.c.0.s8 %v712
          %v714 = vlaneseq
          %v715 = vshrl.u32 %v714, 7
          %v716 = vsub.s32 %v713, %v715
          %v717 = vrot.slane %v703, %v716
          %v718 = vcombine.low %v710, %v717
          %v719 = vcombine.low %v609, %v615
          %v720 = vcombine.low %v621, %v627
          %v722 = vunpack.c.l.s4 1983009808
          %v723 = vunpack.c.0.s8 %v722
          %v724 = vlaneseq
          %v725 = vshrl.u32 %v724, 7
          %v726 = vsub.s32 %v723, %v725
          %v727 = vrot.slane %v719, %v726
          %v729 = vunpack.c.l.s4 1983009808
          %v730 = vunpack.c.0.s8 %v729
          %v731 = vlaneseq
          %v732 = vshrl.u32 %v731, 7
          %v733 = vsub.s32 %v730, %v732
          %v734 = vrot.slane %v720, %v733
          %v735 = vcombine.low %v727, %v734
          %vm736 = vcmask 1044484
          %v737 = vsel %vm736, %v718, %v718
          %vm738 = vcmask 1046534
          %v739 = vsel %vm738, %v718, %v737
          %v740 = vrot.slane %v735, 7
          %vm741 = vcmask 1041409
          %v742 = vsel %vm741, %v740, %v739
          %vm743 = vcmask 1043459
          %v744 = vsel %vm743, %v740, %v742
          %vm745 = vcmask 1045509
          %v746 = vsel %vm745, %v740, %v744
          %vm747 = vcmask 1047559
          %v748 = vsel %vm747, %v740, %v746
          %v750 = vmax.f32 %v693, %v748
          %751 = vst [vmem:[#allocation6] sm:$0xff] %v750
        $region93: #{tpu_custom_call.1} parent=76 // pred_fallthru
          _
        // Predicated region
        $region94: #{tpu_custom_call.1} parent=76 // pred_check
          %p752 = pneg %p160
        $region95: #{tpu_custom_call.1} parent=76 // pred_check_branch
          %754 = sbr.rel (%p752) target = $region97
        $region96: #{tpu_custom_call.1} parent=76 // pred_region
          %s756 = ssub.s32 128, 128
          %757 = vsyncadd [#allocation5], %s756
          %s758 = smul.addr %s22, 4
          %s759 = smul.addr %s758, 32
          %s760 = scalar_lea.hbm %s5, %s759
          %s762 = sshll.u32 [#allocation6], 4
          %s763 = int_to_ptr.vmem [resolvable:$true] %s762
          %765 = dma.vmem_to_hbm [thread:$0]  %s763, 128, %s760, [#allocation5]
        $region97: #{tpu_custom_call.1} parent=76 // pred_fallthru
          _
        // Predicated region
        $region98: #{tpu_custom_call.1} parent=76 // pred_check
          %p766 = pneg %p160
        $region99: #{tpu_custom_call.1} parent=76 // pred_check_branch
          %768 = sbr.rel (%p766) target = $region101
        $region100: #{tpu_custom_call.1} parent=76 // pred_region
          %769 = dma.done [#allocation5], 128
        $region101: #{tpu_custom_call.1} parent=76 // pred_fallthru
          _
      $region77: #{tpu_custom_call.1} parent=5 // pred_fallthru
        _
      %p770 = scmp.le.s32.totalorder 2, %s13
      // Predicated region
      $region102: #{tpu_custom_call.1} parent=5 // pred_check
        %p771 = pneg %p770
      $region103: #{tpu_custom_call.1} parent=5 // pred_check_branch
        %773 = sbr.rel (%p771) target = $region105
      $region104: #{tpu_custom_call.1} parent=5 // pred_region
        %s774 = ssub.s32 %s13, 2
      $region105: #{tpu_custom_call.1} parent=5 // pred_fallthru
        _
    $region6: #{tpu_custom_call.1} parent=1 // loop_footer
      %s17 = sadd.s32 1, %s13
    $region7: #{tpu_custom_call.1} parent=1 // loop_footer_branch
      %12 = sbr.rel target = $region3
    $region8: #{tpu_custom_call.1} parent=1 // loop_exit
      _
    %775 = vsyncpa [#allocation4], 1
    %s776 = scalar_lea.sflag [#allocation4], 1
    %777 = vsyncpa %s776, 1
    %778 = vsyncpa [#allocation5], 1
    %s779 = scalar_lea.sflag [#allocation5], 1
    %780 = vsyncpa %s779, 1

</llo_original>
